<compile_context>
chip_gen: v5e
topology: v5e:2x2
jax: 0.10.0
libtpu: 0.0.40
codegen_flags: <defaults>
</compile_context>

<pallas_src>
import math

import jax
import jax.numpy as jnp
from jax.experimental import pallas as pl
from jax.experimental.pallas import tpu as pltpu


def _round_up(x, m):
    return ((x + m - 1) // m) * m


def _vmem_budget_bytes():
    """~75% of per-core physical VMEM: 96 MiB on v5e/v6e (128 MiB parts),
    48 MiB on v7x (64 MiB per TensorCore). Conservative fallback if the
    hardware query is unavailable."""
    cap = 64 << 20  # v7x per-TensorCore physical VMEM (safe lower bound)
    get_info = getattr(pltpu, "get_tpu_info", None)
    if get_info is not None:
        try:
            cap = int(get_info().vmem_capacity_bytes)
        except Exception:
            pass
    return (cap * 3) // 4


def _num_tensorcores():
    """Best-effort TensorCore count (2 on v7x / megacore parts)."""
    get_info = getattr(pltpu, "get_tpu_info", None)
    if get_info is None:
        return 1
    try:
        info = get_info()
    except Exception:
        return 1
    for name in ("num_cores", "core_count", "num_tensorcores",
                 "tensor_core_count", "cores_per_chip"):
        v = getattr(info, name, None)
        if isinstance(v, int) and v > 0:
            return v
    return 1


def _pick_tile(dim, cap, aligns):
    """Pick a tile for `dim`.

    Preference order:
      1. dim <= cap           -> single full-extent block (no pad, no align needed)
      2. aligned divisor<=cap -> tiled with NO padding (tried at each alignment)
      3. fallback             -> aligned cap tile + zero padding (extra HBM pass)
    Returns (tile, padded_dim).
    """
    if dim <= cap:
        return dim, dim
    for align in aligns:
        t = (cap // align) * align
        while t >= align:
            if dim % t == 0:
                return t, dim
            t -= align
    align = aligns[0]
    t = (cap // align) * align
    return t, _round_up(dim, t)


def _norm_linear_kernel(x_ref, w_ref, o_ref, acc_ref, ssq_ref):
    """out = (sum_k x_k @ w_k) * rsqrt(sum_k colwise ||w_k||^2).

    K-innermost grid; f32 MXU accumulation into a VMEM scratch; the per-column
    squared norm of W is accumulated on VPU/XLU slots (free while the MXU is
    busy), so W needs no separate normalization pass over HBM.
    """
    k = pl.program_id(2)

    @pl.when(k == 0)
    def _():
        acc_ref[...] = jnp.zeros_like(acc_ref)
        ssq_ref[...] = jnp.zeros_like(ssq_ref)

    w = w_ref[...]
    acc_ref[...] += jnp.dot(x_ref[...], w, preferred_element_type=jnp.float32)
    wf = w.astype(jnp.float32)
    ssq_ref[...] += jnp.sum(wf * wf, axis=0, keepdims=True)

    @pl.when(k == pl.num_programs(2) - 1)
    def _():
        # rsqrt(max(ssq, 1e-24)) == 1 / max(||w_col||, 1e-12)  (F.normalize eps)
        inv = jax.lax.rsqrt(jnp.maximum(ssq_ref[...], 1e-24))
        o_ref[...] = (acc_ref[...] * inv).astype(o_ref.dtype)


def _norm_linear_kernel_f32out(x_ref, w_ref, o_ref, ssq_ref):
    """float32-output variant: accumulate directly into the resident output
    block (its index_map ignores k), saving the tm*tn*4B scratch and the final
    acc->out copy."""
    k = pl.program_id(2)

    @pl.when(k == 0)
    def _():
        o_ref[...] = jnp.zeros_like(o_ref)
        ssq_ref[...] = jnp.zeros_like(ssq_ref)

    w = w_ref[...]
    o_ref[...] += jnp.dot(x_ref[...], w, preferred_element_type=jnp.float32)
    wf = w.astype(jnp.float32)
    ssq_ref[...] += jnp.sum(wf * wf, axis=0, keepdims=True)

    @pl.when(k == pl.num_programs(2) - 1)
    def _():
        o_ref[...] = o_ref[...] * jax.lax.rsqrt(jnp.maximum(ssq_ref[...], 1e-24))


def norm_linear(x, weight, *, tm=None, tn=None, tk=None, vmem_limit_bytes=None):
    """Pallas equivalent of NormLinear.forward: x @ F.normalize(weight, dim=0)."""
    in_dim, out_dim = weight.shape
    lead = x.shape[:-1]
    M = int(math.prod(lead)) if lead else 1
    x2 = x.reshape(M, in_dim)
    out_dtype = jnp.result_type(x.dtype, weight.dtype)

    x_it = jnp.dtype(x2.dtype).itemsize
    w_it = jnp.dtype(weight.dtype).itemsize
    o_it = jnp.dtype(out_dtype).itemsize
    wide = max(x_it, w_it) >= 4  # float32 operands

    budget = _vmem_budget_bytes()
    big_vmem = budget >= (80 << 20)  # 128-MiB VMEM parts (v5e/v6e)

    # Tile caps sized to fill (most of) the per-core VMEM budget.
    if wide:
        tm_cap, tn_cap, tk_cap = (1024, 1024, 2048) if big_vmem else (512, 1024, 1024)
    else:
        tm_cap, tn_cap, tk_cap = (1024, 2048, 2048) if big_vmem else (1024, 1024, 2048)

    m_align = 8 if x_it >= 4 else (16 if x_it == 2 else 32)

    if tm is None:
        tm, Mp = _pick_tile(M, tm_cap, (m_align,))
    else:
        Mp = _round_up(M, tm)
    if tn is None:
        # 256-aligned first (v6e/v7x MXU passes are 256x256; also valid on v5e),
        # 128-aligned as a pad-free fallback.
        tn, Np = _pick_tile(out_dim, tn_cap, (256, 128))
    else:
        Np = _round_up(out_dim, tn)
    if tk is None:
        tk, Kp = _pick_tile(in_dim, tk_cap, (256, 128))
    else:
        Kp = _round_up(in_dim, tk)

    # Megacore (v7x and other 2-TC parts): make sure the "parallel" (i, j) grid
    # has >= 2 blocks so both TensorCores get work.  Only split when it stays
    # aligned and pad-free, and when there is meaningful work to split.
    if (Mp // tm) * (Np // tn) < 2 and _num_tensorcores() >= 2:
        if tn == Np and Np >= 512 and Np % 256 == 0:
            tn = Np // 2
        elif tm == Mp and Mp >= 256 and Mp % (2 * m_align) == 0:
            tm = Mp // 2

    # Zero-pad only when unavoidable (a pad is a full extra HBM pass over the
    # operand).  K zero-padding is inert for both the matmul and the column
    # sum-of-squares; padded M rows / N cols are sliced off below.
    if (Mp, Kp) != (M, in_dim):
        x2 = jnp.pad(x2, ((0, Mp - M), (0, Kp - in_dim)))
    w = weight
    if (Kp, Np) != (in_dim, out_dim):
        w = jnp.pad(w, ((0, Kp - in_dim), (0, Np - out_dim)))

    grid = (Mp // tm, Np // tn, Kp // tk)

    direct_f32 = out_dtype == jnp.float32
    if direct_f32:
        kernel = _norm_linear_kernel_f32out
        scratch = [pltpu.VMEM((1, tn), jnp.float32)]
    else:
        kernel = _norm_linear_kernel
        scratch = [pltpu.VMEM((tm, tn), jnp.float32),
                   pltpu.VMEM((1, tn), jnp.float32)]

    # Per-step VMEM footprint: double-buffered x/w/out blocks + scratch.
    est = (2 * tm * tk * x_it
           + 2 * tk * tn * w_it
           + 2 * tm * tn * o_it
           + (0 if direct_f32 else tm * tn * 4)
           + 8 * tn * 4)
    if vmem_limit_bytes is None:
        vmem_limit_bytes = int(max(32 << 20, min(budget, int(1.5 * est) + (4 << 20))))

    cost = pl.CostEstimate(
        flops=2 * Mp * Np * Kp,
        transcendentals=0,
        bytes_accessed=Mp * Kp * x_it + Kp * Np * w_it + Mp * Np * o_it,
    )

    out = pl.pallas_call(
        kernel,
        out_shape=jax.ShapeDtypeStruct((Mp, Np), out_dtype),
        grid_spec=pltpu.PrefetchScalarGridSpec(
            num_scalar_prefetch=0,
            grid=grid,
            in_specs=[
                pl.BlockSpec((tm, tk), lambda i, j, k: (i, k)),   # x tile
                pl.BlockSpec((tk, tn), lambda i, j, k: (k, j)),   # weight tile
            ],
            out_specs=pl.BlockSpec((tm, tn), lambda i, j, k: (i, j)),
            scratch_shapes=scratch,
        ),
        compiler_params=pltpu.CompilerParams(
            dimension_semantics=("parallel", "parallel", "arbitrary"),
            vmem_limit_bytes=vmem_limit_bytes,
        ),
        cost_estimate=cost,
    )(x2, w)

    out = out[:M, :out_dim]
    return out.reshape(*lead, out_dim)


def init_norm_linear_weight(key, in_dim, out_dim, dtype=jnp.float32):
    # nn.init.xavier_uniform_ with gain = calculate_gain('relu') = sqrt(2)
    gain = math.sqrt(2.0)
    bound = gain * math.sqrt(6.0 / (in_dim + out_dim))
    return jax.random.uniform(
        key, (in_dim, out_dim), dtype=dtype, minval=-bound, maxval=bound
    )


if __name__ == "__main__":
    key = jax.random.PRNGKey(0)
    k_w, k_x = jax.random.split(key)

    in_dim, out_dim = 32, 64
    batch, seq = 2, 8  # x: (batch, seq, in_dim), matching torch.matmul broadcasting

    weight = init_norm_linear_weight(k_w, in_dim, out_dim)
    x = jax.random.normal(k_x, (batch, seq, in_dim), dtype=jnp.float32)

    # float32 path (accumulates directly into the resident output block).
    out = jax.block_until_ready(norm_linear(x, weight))
    w_n = weight / jnp.maximum(jnp.linalg.norm(weight, axis=0, keepdims=True), 1e-12)
    ref = x @ w_n
    assert out.shape == (batch, seq, out_dim)
    assert jnp.allclose(out, ref, atol=1e-4, rtol=1e-4)

    # bfloat16 path (f32 VMEM accumulator scratch + downcast on store).
    x_bf = x.astype(jnp.bfloat16)
    w_bf = weight.astype(jnp.bfloat16)
    out_bf = jax.block_until_ready(norm_linear(x_bf, w_bf))
    w_bf_f32 = w_bf.astype(jnp.float32)
    w_bf_n = w_bf_f32 / jnp.maximum(
        jnp.linalg.norm(w_bf_f32, axis=0, keepdims=True), 1e-12
    )
    ref_bf = x_bf.astype(jnp.float32) @ w_bf_n
    assert out_bf.dtype == jnp.bfloat16
    assert jnp.allclose(out_bf.astype(jnp.float32), ref_bf, atol=5e-2, rtol=5e-2)

    print("KERNEL_OK")
</pallas_src>

<mosaic_0001>
module attributes {stable_mosaic.version = 11 : i64} {
  func.func @_norm_linear_kernel_f32out(%arg0: i32, %arg1: i32, %arg2: i32, %arg3: memref<16x32xf32, #tpu.memory_space<vmem>>, %arg4: memref<32x64xf32, #tpu.memory_space<vmem>>, %arg5: memref<16x64xf32, #tpu.memory_space<vmem>>, %arg6: memref<1x64xf32, #tpu.memory_space<vmem>>) attributes {dimension_semantics = [#tpu.dimension_semantics<parallel>, #tpu.dimension_semantics<parallel>, #tpu.dimension_semantics<arbitrary>], iteration_bounds = array<i64: 1, 1, 1>, scalar_prefetch = 0 : i64, scratch_operands = 1 : i64, tpu.core_type = #tpu.core_type<tc>, window_params = [{transform_indices = @transform_0, window_bounds = array<i64: 16, 32>}, {transform_indices = @transform_1, window_bounds = array<i64: 32, 64>}, {transform_indices = @transform_2, window_bounds = array<i64: 16, 64>}]} {
    %c0_i32 = arith.constant 0 : i32
    %0 = arith.cmpi eq, %arg2, %c0_i32 : i32
    %1 = arith.extui %0 : i1 to i32
    %c0_i32_0 = arith.constant 0 : i32
    %2 = arith.cmpi ne, %1, %c0_i32_0 : i32
    scf.if %2 {
      %cst_15 = arith.constant 0.000000e+00 : f32
      %18 = vector.broadcast %cst_15 : f32 to vector<16x64xf32>
      %c0_16 = arith.constant 0 : index
      %c0_17 = arith.constant 0 : index
      %19 = vector.load %arg5[%c0_16, %c0_17] : memref<16x64xf32, #tpu.memory_space<vmem>>, vector<16x64xf32>
      tpu.vector_store %arg5[%c0_16, %c0_17], %18 {strides = array<i32>} : memref<16x64xf32, #tpu.memory_space<vmem>>, vector<16x64xf32>,
      %cst_18 = arith.constant 0.000000e+00 : f32
      %20 = vector.broadcast %cst_18 : f32 to vector<1x64xf32>
      %c0_19 = arith.constant 0 : index
      %c0_20 = arith.constant 0 : index
      %21 = vector.load %arg6[%c0_19, %c0_20] : memref<1x64xf32, #tpu.memory_space<vmem>>, vector<1x64xf32>
      tpu.vector_store %arg6[%c0_19, %c0_20], %20 {strides = array<i32>} : memref<1x64xf32, #tpu.memory_space<vmem>>, vector<1x64xf32>,
    } else {
    }
    %c0 = arith.constant 0 : index
    %c0_1 = arith.constant 0 : index
    %3 = vector.load %arg4[%c0, %c0_1] : memref<32x64xf32, #tpu.memory_space<vmem>>, vector<32x64xf32>
    %c0_2 = arith.constant 0 : index
    %c0_3 = arith.constant 0 : index
    %4 = vector.load %arg5[%c0_2, %c0_3] : memref<16x64xf32, #tpu.memory_space<vmem>>, vector<16x64xf32>
    %c0_4 = arith.constant 0 : index
    %c0_5 = arith.constant 0 : index
    %5 = vector.load %arg3[%c0_4, %c0_5] : memref<16x32xf32, #tpu.memory_space<vmem>>, vector<16x32xf32>
    %cst = arith.constant dense<0.000000e+00> : vector<16x64xf32>
    %6 = tpu.matmul %5, %3, %cst {dimension_numbers = #tpu.dot_dimension_numbers<[1], [0], [0], [1], [0, 0, 1, 1], [], []>} : vector<16x32xf32>, vector<32x64xf32>, vector<16x64xf32> -> vector<16x64xf32>
    %7 = arith.addf %4, %6 : vector<16x64xf32>
    %c0_6 = arith.constant 0 : index
    %c0_7 = arith.constant 0 : index
    %8 = vector.load %arg5[%c0_6, %c0_7] : memref<16x64xf32, #tpu.memory_space<vmem>>, vector<16x64xf32>
    tpu.vector_store %arg5[%c0_6, %c0_7], %7 {strides = array<i32>} : memref<16x64xf32, #tpu.memory_space<vmem>>, vector<16x64xf32>,
    %c0_8 = arith.constant 0 : index
    %c0_9 = arith.constant 0 : index
    %9 = vector.load %arg6[%c0_8, %c0_9] : memref<1x64xf32, #tpu.memory_space<vmem>>, vector<1x64xf32>
    %10 = arith.mulf %3, %3 : vector<32x64xf32>
    %cst_10 = arith.constant dense<0.000000e+00> : vector<64xf32>
    %11 = vector.multi_reduction <add>, %10, %cst_10 [0] : vector<32x64xf32> to vector<64xf32>
    %12 = vector.shape_cast %11 : vector<64xf32> to vector<1x64xf32>
    %13 = arith.addf %9, %12 : vector<1x64xf32>
    %c0_11 = arith.constant 0 : index
    %c0_12 = arith.constant 0 : index
    %14 = vector.load %arg6[%c0_11, %c0_12] : memref<1x64xf32, #tpu.memory_space<vmem>>, vector<1x64xf32>
    tpu.vector_store %arg6[%c0_11, %c0_12], %13 {strides = array<i32>} : memref<1x64xf32, #tpu.memory_space<vmem>>, vector<1x64xf32>,
    %c0_i32_13 = arith.constant 0 : i32
    %15 = arith.cmpi eq, %arg2, %c0_i32_13 : i32
    %16 = arith.extui %15 : i1 to i32
    %c0_i32_14 = arith.constant 0 : i32
    %17 = arith.cmpi ne, %16, %c0_i32_14 : i32
    scf.if %17 {
      %c0_15 = arith.constant 0 : index
      %c0_16 = arith.constant 0 : index
      %18 = vector.load %arg5[%c0_15, %c0_16] : memref<16x64xf32, #tpu.memory_space<vmem>>, vector<16x64xf32>
      %c0_17 = arith.constant 0 : index
      %c0_18 = arith.constant 0 : index
      %19 = vector.load %arg6[%c0_17, %c0_18] : memref<1x64xf32, #tpu.memory_space<vmem>>, vector<1x64xf32>
      %cst_19 = arith.constant 1.000000e-24 : f32
      %20 = vector.broadcast %cst_19 : f32 to vector<1x64xf32>
      %21 = arith.maximumf %19, %20 : vector<1x64xf32>
      %22 = math.rsqrt %21 : vector<1x64xf32>
      %23 = vector.broadcast %22 : vector<1x64xf32> to vector<16x64xf32>
      %24 = arith.mulf %18, %23 : vector<16x64xf32>
      %c0_20 = arith.constant 0 : index
      %c0_21 = arith.constant 0 : index
      %25 = vector.load %arg5[%c0_20, %c0_21] : memref<16x64xf32, #tpu.memory_space<vmem>>, vector<16x64xf32>
      tpu.vector_store %arg5[%c0_20, %c0_21], %24 {strides = array<i32>} : memref<16x64xf32, #tpu.memory_space<vmem>>, vector<16x64xf32>,
    } else {
    }
    return
  }
  func.func @transform_0(%arg0: i32, %arg1: i32, %arg2: i32) -> (i32, i32) {
    %c0_i32 = arith.constant 0 : i32
    return %arg0, %arg2 : i32, i32
  }
  func.func @transform_1(%arg0: i32, %arg1: i32, %arg2: i32) -> (i32, i32) {
    %c0_i32 = arith.constant 0 : i32
    return %arg2, %arg1 : i32, i32
  }
  func.func @transform_2(%arg0: i32, %arg1: i32, %arg2: i32) -> (i32, i32) {
    %c0_i32 = arith.constant 0 : i32
    return %arg0, %arg1 : i32, i32
  }
}

</mosaic_0001>

<llo_original>
// kernel: tpu_custom_call.1
$region0: #{tpu_custom_call.1}
  #allocation0 [shape = 'u32[]', space=smem, size = 0x4, offset = 0x4, fixed_abs, tag = 'smem constant byte address 0x4 - core index']
  #allocation1 [shape = 'u32[72,128]{1,0:T(1,128)}', space=vmem, size = 0x9000, scoped, tag = 'internal scratch']
  #allocation2 [shape = 'f32[1,64]{1,0:T(1,128)}', space=vmem, size = 0x200, scoped, tag = 'scratch operand']
  %s0 = inlined_call_operand.hbm [shape: f32[16,32], index: 0, kind: input, shape index: {}]
  %s1 = inlined_call_operand.hbm [shape: f32[32,64], index: 1, kind: input, shape index: {}]
  %s2 = inlined_call_operand.hbm [shape: f32[16,64], index: 2, kind: output, shape index: {}]
  %s3 = sld [smem:[#allocation0]]
  $region34: #{tpu_custom_call.1} parent=0
    _
  %s5 = ssub.s32 1, %s3
  %s6 = scalar_select 0, %s5, %s3
  $region1: #{tpu_custom_call.1} parent=0
    #allocation3 [shape = 'u8[8192]{0}', space=vmem, size = 0x2000, scoped, tag = 'input window, operand 0, single buffered']
    #allocation4 [shape = 's32[1]{0}', space=sflag, size = 0x4, scoped, tag = 'scoped memory for tpu_custom_call.1']
    #allocation5 [shape = 's32[1]{0}', space=sflag, size = 0x4, scoped, tag = 'scoped memory for tpu_custom_call.1']
    #allocation6 [shape = 'u8[16384]{0}', space=vmem, size = 0x4000, scoped, tag = 'input window, operand 1, single buffered']
    #allocation7 [shape = 's32[1]{0}', space=sflag, size = 0x4, scoped, tag = 'scoped memory for tpu_custom_call.1']
    #allocation8 [shape = 'u8[8192]{0}', space=vmem, size = 0x2000, scoped, tag = 'output window, operand 0, single buffered']
    %7 = vsyncpa [#allocation4], 0
    %8 = vsyncpa [#allocation7], 0
    %9 = vsyncpa [#allocation5], 0
    // Predicated region
    $region2: #{tpu_custom_call.1} parent=1 // pred_check
      _
    $region3: #{tpu_custom_call.1} parent=1 // pred_check_branch
      %11 = sbr.rel (0) target = $region5
    $region4: #{tpu_custom_call.1} parent=1 // pred_region
      %13 = vsyncadd [#allocation4], 0
      %s14 = sshll.u32 %s0, 4
      %s15 = int_to_ptr.hbm [resolvable:$true] %s14
      %s16 = sshll.u32 [#allocation3], 4
      %s17 = int_to_ptr.vmem [resolvable:$true] %s16
      %22 = dma.hbm_to_vmem [thread:$0]  %s15, 256, %s17, [#allocation4], 128, 128, 8
    $region5: #{tpu_custom_call.1} parent=1 // pred_fallthru
      _
    // Predicated region
    $region6: #{tpu_custom_call.1} parent=1 // pred_check
      _
    $region7: #{tpu_custom_call.1} parent=1 // pred_check_branch
      %24 = sbr.rel (0) target = $region9
    $region8: #{tpu_custom_call.1} parent=1 // pred_region
      %26 = vsyncadd [#allocation7], 0
      %s27 = sshll.u32 %s1, 4
      %s28 = int_to_ptr.hbm [resolvable:$true] %s27
      %s29 = sshll.u32 [#allocation6], 4
      %s30 = int_to_ptr.vmem [resolvable:$true] %s29
      %35 = dma.hbm_to_vmem [thread:$0]  %s28, 512, %s30, [#allocation7], 128, 128, 8
    $region9: #{tpu_custom_call.1} parent=1 // pred_fallthru
      _
    // Predicated region
    $region10: #{tpu_custom_call.1} parent=1 // pred_check
      _
    $region11: #{tpu_custom_call.1} parent=1 // pred_check_branch
      %37 = sbr.rel (0) target = $region13
    $region12: #{tpu_custom_call.1} parent=1 // pred_region
      %39 = dma.done [#allocation4], 256
    $region13: #{tpu_custom_call.1} parent=1 // pred_fallthru
      _
    // Predicated region
    $region14: #{tpu_custom_call.1} parent=1 // pred_check
      _
    $region15: #{tpu_custom_call.1} parent=1 // pred_check_branch
      %41 = sbr.rel (0) target = $region17
    $region16: #{tpu_custom_call.1} parent=1 // pred_region
      %43 = dma.done [#allocation7], 512
    $region17: #{tpu_custom_call.1} parent=1 // pred_fallthru
      _
    %p44 = scmp.eq.s32.totalorder 0, 0
    // Predicated region
    $region18: #{tpu_custom_call.1} parent=1 // pred_check
      %p45 = pneg %p44
    $region19: #{tpu_custom_call.1} parent=1 // pred_check_branch
      %47 = sbr.rel (%p45) target = $region21
    $region20: #{tpu_custom_call.1} parent=1 // pred_region
      %vm48 = vcmask 523264
      %49 = vst.msk [vmem:[#allocation8] sm:$0xff] %vm48, 0.0
      %50 = vst.msk [vmem:[#allocation8 + $0x8] sm:$0xff] %vm48, 0.0
      %vm51 = vcmask 516096
      %52 = vst.msk [vmem:[#allocation2] sm:$0x1] %vm51, 0.0
    $region21: #{tpu_custom_call.1} parent=1 // pred_fallthru
      _
    %v53 = vld [vmem:[#allocation6] sm:$0xff]
    %v54 = vld [vmem:[#allocation6 + $0x8] sm:$0xff]
    %v55 = vld [vmem:[#allocation6 + $0x10] sm:$0xff]
    %v56 = vld [vmem:[#allocation6 + $0x18] sm:$0xff]
    %v57 = vld [vmem:[#allocation8] sm:$0xff]
    %v58 = vld [vmem:[#allocation8 + $0x8] sm:$0xff]
    %v59 = vld [vmem:[#allocation3] sm:$0xff]
    %v60 = vld [vmem:[#allocation3 + $0x8] sm:$0xff]
    %vm61 = vcmask 261120
    %v63 = vsel %vm61, %v59, 0
    %v66 = vsel %vm61, %v60, 0
    %68 = vmatpush.msra.mxu0 0.0
    %69 = vmatpush.msra.mxu0 0.0
    %70 = vmatpush.msra.mxu0 0.0
    %71 = vmatpush.msra.mxu0 0.0
    %72 = vmatpush.msra.mxu0 0.0
    %73 = vmatpush.msra.mxu0 0.0
    %74 = vmatpush.msra.mxu0 0.0
    %75 = vmatpush.msra.mxu0 0.0
    %76 = vmatpush.msra.mxu0 0.0
    %77 = vmatpush.msra.mxu0 0.0
    %78 = vmatpush.msra.mxu0 0.0
    %79 = vmatpush.msra.mxu0 0.0
    %80 = vmatpush.msra.mxu0 %v56
    %81 = vmatpush.msra.mxu0 %v55
    %82 = vmatpush.msra.mxu0 %v54
    %83 = vmatpush.msra.mxu0 %v53
    %84 = vmatmul.f32.gmra.mxu0 %v63
    %v85 = vpop.f32.mrf.mxu0
    %v86 = vadd.f32 0.0, %v85
    %87 = vmatmul.f32.gmra.mxu0 %v66
    %v88 = vpop.f32.mrf.mxu0
    %v89 = vadd.f32 0.0, %v88
    %90 = vdwg.mxu0
    %v91 = vadd.f32 %v57, %v86
    %v92 = vadd.f32 %v58, %v89
    %vm93 = vcmask 523264
    %94 = vst.msk [vmem:[#allocation8] sm:$0xff] %vm93, %v91
    %95 = vst.msk [vmem:[#allocation8 + $0x8] sm:$0xff] %vm93, %v92
    %v96 = vld [vmem:[#allocation2] sm:$0x1]
    %v97 = vmul.f32 %v53, %v53
    %v98 = vmul.f32 %v54, %v54
    %v99 = vmul.f32 %v55, %v55
    %v100 = vmul.f32 %v56, %v56
    %v101 = vsel %vm93, %v97, 0.0
    %v102 = vsel %vm93, %v98, 0.0
    %v103 = vadd.f32 %v101, %v102
    %v104 = vsel %vm93, %v99, 0.0
    %v105 = vadd.f32 %v103, %v104
    %v106 = vsel %vm93, %v100, 0.0
    %v107 = vadd.f32 %v105, %v106
    %v108 = vrot.slane %v107, 4
    %v109 = vadd.f32 %v107, %v108
    %v110 = vrot.slane %v109, 2
    %v111 = vadd.f32 %v109, %v110
    %v112 = vrot.slane %v111, 1
    %v113 = vadd.f32 %v111, %v112
    %v114 = vadd.f32 %v96, %v113
    %vm115 = vcmask 516096
    %116 = vst.msk [vmem:[#allocation2] sm:$0x1] %vm115, %v114
    // Predicated region
    $region22: #{tpu_custom_call.1} parent=1 // pred_check
      %p117 = pneg %p44
    $region23: #{tpu_custom_call.1} parent=1 // pred_check_branch
      %119 = sbr.rel (%p117) target = $region25
    $region24: #{tpu_custom_call.1} parent=1 // pred_region
      %v120 = vld [vmem:[#allocation8] sm:$0xff]
      %v121 = vld [vmem:[#allocation8 + $0x8] sm:$0xff]
      %v122 = vld [vmem:[#allocation2] sm:$0x1]
      %v123 = vmax.f32 %v122, 1e-24
      %v124 = vrsqrt.pop %v123
      %v125 = vmul.f32 %v124, %v123
      %v126 = vmul.f32 %v125, %v124
      %v127 = vmul.f32 0.5, %v126
      %v128 = vsub.f32 1.5, %v127
      %v129 = vmul.f32 %v124, %v128
      %vm130 = vweird.f32 %v123
      %vm131 = vweird.f32 %v124
      %vm132 = vmor %vm130, %vm131
      %v133 = vsel %vm132, %v124, %v129
      %v135 = vperm.slane %v133, 0
      %v137 = vmul.f32 %v120, %v135
      %v138 = vmul.f32 %v121, %v135
      %139 = vst.msk [vmem:[#allocation8] sm:$0xff] %vm93, %v137
      %140 = vst.msk [vmem:[#allocation8 + $0x8] sm:$0xff] %vm93, %v138
    $region25: #{tpu_custom_call.1} parent=1 // pred_fallthru
      _
    // Predicated region
    $region26: #{tpu_custom_call.1} parent=1 // pred_check
      _
    $region27: #{tpu_custom_call.1} parent=1 // pred_check_branch
      %142 = sbr.rel (0) target = $region29
    $region28: #{tpu_custom_call.1} parent=1 // pred_region
      %144 = vsyncadd [#allocation5], 0
      %s145 = sshll.u32 [#allocation8], 4
      %s146 = int_to_ptr.vmem [resolvable:$true] %s145
      %s147 = sshll.u32 %s2, 4
      %s148 = int_to_ptr.hbm [resolvable:$true] %s147
      %153 = dma.vmem_to_hbm [thread:$0]  %s146, 256, %s148, [#allocation5], 128, 128, 8
    $region29: #{tpu_custom_call.1} parent=1 // pred_fallthru
      _
    // Predicated region
    $region30: #{tpu_custom_call.1} parent=1 // pred_check
      _
    $region31: #{tpu_custom_call.1} parent=1 // pred_check_branch
      %155 = sbr.rel (0) target = $region33
    $region32: #{tpu_custom_call.1} parent=1 // pred_region
      %157 = dma.done [#allocation5], 256
    $region33: #{tpu_custom_call.1} parent=1 // pred_fallthru
      _
    %158 = vsyncpa [#allocation4], 1
    %159 = vsyncpa [#allocation7], 1
    %160 = vsyncpa [#allocation5], 1

</llo_original>
